<compile_context>
chip_gen: v6e
topology: v6e:2x2x1
jax: 0.10.0
libtpu: 0.0.40
codegen_flags: <defaults>
</compile_context>

<pallas_src>
import jax
import jax.numpy as jnp
from jax.experimental import pallas as pl
from jax.experimental.pallas import tpu as pltpu

LANES = 128


def _round_up(n, m):
    return ((n + m - 1) // m) * m


def init_params(key, tasks_n=9, input_size=1, hidden_size_0=12, hidden_size_1=6, output_size=1):
    """Deterministic init mimicking nn.Linear default: uniform(-1/sqrt(fan_in), 1/sqrt(fan_in)).
    Weights stored as (in, out); task heads stacked: w2 (tasks_n, h1, out), b2 (tasks_n, out)."""
    def u(k, shape, bound):
        return jax.random.uniform(k, shape, jnp.float32, -bound, bound)

    k = jax.random.split(key, 6)
    bnd0 = 1.0 / float(input_size) ** 0.5
    bnd1 = 1.0 / float(hidden_size_0) ** 0.5
    bnd2 = 1.0 / float(hidden_size_1) ** 0.5
    return {
        "w0": u(k[0], (input_size, hidden_size_0), bnd0),
        "b0": u(k[1], (hidden_size_0,), bnd0),
        "w1": u(k[2], (hidden_size_0, hidden_size_1), bnd1),
        "b1": u(k[3], (hidden_size_1,), bnd1),
        "w2": u(k[4], (tasks_n, hidden_size_1, output_size), bnd2),
        "b2": u(k[5], (tasks_n, output_size), bnd2),
    }


def reference_forward(x, params, task_id):
    h = jnp.maximum(x @ params["w0"] + params["b0"], 0.0)
    h = jnp.maximum(h @ params["w1"] + params["b1"], 0.0)
    return h @ params["w2"][task_id] + params["b2"][task_id]


def multitasker_forward(x, params, task_id, *, block_rows=256):
    """x: (B, input_size) float32, task_id: Python int (mirrors the PyTorch forward)."""
    w0, b0 = params["w0"], params["b0"]
    w1, b1 = params["w1"], params["b1"]
    w2, b2 = params["w2"], params["b2"]
    tasks_n = w2.shape[0]
    if not task_id < tasks_n:          # mirror the PyTorch check exactly
        raise ValueError("Invalid task_id")

    in_size, H0 = w0.shape
    H1 = w1.shape[1]
    out_size = w2.shape[2]
    B = x.shape[0]

    # ---- pack trunk + selected head into one flat f32 SMEM array --------------------------
    OFF_W0 = 0                          # (in, H0) row-major -> f*H0 + j
    OFF_B0 = OFF_W0 + in_size * H0
    OFF_W1 = OFF_B0 + H0                # (H0, H1) row-major -> j*H1 + k
    OFF_B1 = OFF_W1 + H0 * H1
    OFF_W2 = OFF_B1 + H1                # (H1, out) row-major -> k*out + m
    OFF_B2 = OFF_W2 + H1 * out_size

    packed = jnp.concatenate([
        w0.reshape(-1), b0.reshape(-1),
        w1.reshape(-1), b1.reshape(-1),
        w2[task_id].reshape(-1), b2[task_id].reshape(-1),
    ]).astype(jnp.float32)

    # ---- lane-dense slab: batch on the 128-lane axis ---------------------------------------
    rows_needed = -(-B // LANES)
    br = max(8, _round_up(min(int(block_rows), rows_needed), 8))   # block rows, multiple of 8
    R = _round_up(rows_needed, br)
    padded_B = R * LANES
    n_blocks = R // br

    xt = jnp.transpose(x.astype(jnp.float32))                      # (in, B)
    xt = jnp.pad(xt, ((0, 0), (0, padded_B - B)))
    x_slab = xt.reshape(in_size, R, LANES)

    # ---- kernel: pure VPU elementwise FMAs, scalar weights read from SMEM ------------------
    def kernel(p_ref, x_ref, o_ref):
        # Hoist the vector loads of x (one per input feature) and reuse across all H0 outputs.
        xs = [x_ref[f] for f in range(in_size)]

        # Layer 0: h0_j = relu(sum_f x_f * w0[f,j] + b0[j])
        h0 = []
        for j in range(H0):
            acc = xs[0] * p_ref[OFF_W0 + j]
            for f in range(1, in_size):
                acc = acc + xs[f] * p_ref[OFF_W0 + f * H0 + j]
            h0.append(jnp.maximum(acc + p_ref[OFF_B0 + j], 0.0))

        # Layer 1: h1_k = relu(sum_j h0_j * w1[j,k] + b1[k])
        h1 = []
        for k in range(H1):
            acc = h0[0] * p_ref[OFF_W1 + k]
            for j in range(1, H0):
                acc = acc + h0[j] * p_ref[OFF_W1 + j * H1 + k]
            h1.append(jnp.maximum(acc + p_ref[OFF_B1 + k], 0.0))

        # Layer 2: selected task head y_m = sum_k h1_k * w2[k,m] + b2[m]
        for m in range(out_size):
            y = h1[0] * p_ref[OFF_W2 + m]
            for k in range(1, H1):
                y = y + h1[k] * p_ref[OFF_W2 + k * out_size + m]
            o_ref[m] = (y + p_ref[OFF_B2 + m]).astype(o_ref.dtype)

    out_slab = pl.pallas_call(
        kernel,
        out_shape=jax.ShapeDtypeStruct((out_size, R, LANES), jnp.float32),
        grid=(n_blocks,),
        in_specs=[
            pl.BlockSpec(memory_space=pltpu.MemorySpace.SMEM),         # packed scalar params
            pl.BlockSpec((in_size, br, LANES), lambda i: (0, i, 0)),   # lane-dense x tile
        ],
        out_specs=pl.BlockSpec((out_size, br, LANES), lambda i: (0, i, 0)),
        compiler_params=pltpu.CompilerParams(
            dimension_semantics=("parallel",),                         # megacore on v7x
        ),
    )(packed, x_slab)

    y = out_slab.reshape(out_size, padded_B)[:, :B]                    # drop pad
    return jnp.transpose(y).astype(x.dtype)                           # (B, out_size)


if __name__ == "__main__":
    key = jax.random.PRNGKey(0)
    k_x, k_p = jax.random.split(key)

    tasks_n, input_size, hidden_size_0, hidden_size_1, output_size = 9, 1, 12, 6, 1
    params = init_params(k_p, tasks_n, input_size, hidden_size_0, hidden_size_1, output_size)

    # Case 1: lane-aligned batch, multiple grid steps (block_rows=8 -> grid=(2,)), task head 3.
    batch = 2048
    x = jax.random.normal(k_x, (batch, input_size), jnp.float32)
    out = jax.block_until_ready(multitasker_forward(x, params, 3, block_rows=8))
    ref = reference_forward(x, params, 3)
    assert out.shape == (batch, output_size)
    assert jnp.allclose(out, ref, atol=1e-5, rtol=1e-5), "mismatch vs JAX reference (case 1)"

    # Case 2: small ragged batch (needs lane padding), last task head.
    x2 = jax.random.normal(jax.random.PRNGKey(1), (173, input_size), jnp.float32)
    out2 = jax.block_until_ready(multitasker_forward(x2, params, 8))
    ref2 = reference_forward(x2, params, 8)
    assert out2.shape == (173, output_size)
    assert jnp.allclose(out2, ref2, atol=1e-5, rtol=1e-5), "mismatch vs JAX reference (case 2)"

    # Invalid task_id must raise, like the PyTorch module.
    try:
        multitasker_forward(x2, params, tasks_n)
        raise AssertionError("expected ValueError for invalid task_id")
    except ValueError:
        pass

    print("KERNEL_OK")
</pallas_src>

<mosaic_0001>
module attributes {stable_mosaic.version = 11 : i64} {
  func.func @kernel(%arg0: i32, %arg1: memref<109xf32, #tpu.memory_space<smem>>, %arg2: memref<1x8x128xf32, #tpu.memory_space<vmem>>, %arg3: memref<1x8x128xf32, #tpu.memory_space<vmem>>) attributes {dimension_semantics = [#tpu.dimension_semantics<parallel>], iteration_bounds = array<i64: 2>, scalar_prefetch = 0 : i64, scratch_operands = 0 : i64, tpu.core_type = #tpu.core_type<tc>, window_params = [{transform_indices = @transform_0, window_bounds = array<i64: 109>}, {transform_indices = @transform_1, window_bounds = array<i64: 1, 8, 128>}, {transform_indices = @transform_2, window_bounds = array<i64: 1, 8, 128>}]} {
    %c0 = arith.constant 0 : index
    %c0_0 = arith.constant 0 : index
    %c0_1 = arith.constant 0 : index
    %0 = vector.load %arg2[%c0, %c0_0, %c0_1] : memref<1x8x128xf32, #tpu.memory_space<vmem>>, vector<1x8x128xf32>
    %1 = vector.shape_cast %0 : vector<1x8x128xf32> to vector<8x128xf32>
    %c0_2 = arith.constant 0 : index
    %2 = memref.load %arg1[%c0_2] : memref<109xf32, #tpu.memory_space<smem>>
    %3 = vector.broadcast %2 : f32 to vector<8x128xf32>
    %4 = arith.mulf %1, %3 : vector<8x128xf32>
    %c12 = arith.constant 12 : index
    %5 = memref.load %arg1[%c12] : memref<109xf32, #tpu.memory_space<smem>>
    %6 = vector.broadcast %5 : f32 to vector<8x128xf32>
    %7 = arith.addf %4, %6 : vector<8x128xf32>
    %cst = arith.constant 0.000000e+00 : f32
    %8 = vector.broadcast %cst : f32 to vector<8x128xf32>
    %9 = arith.maximumf %7, %8 : vector<8x128xf32>
    %c1 = arith.constant 1 : index
    %10 = memref.load %arg1[%c1] : memref<109xf32, #tpu.memory_space<smem>>
    %11 = vector.broadcast %10 : f32 to vector<8x128xf32>
    %12 = arith.mulf %1, %11 : vector<8x128xf32>
    %c13 = arith.constant 13 : index
    %13 = memref.load %arg1[%c13] : memref<109xf32, #tpu.memory_space<smem>>
    %14 = vector.broadcast %13 : f32 to vector<8x128xf32>
    %15 = arith.addf %12, %14 : vector<8x128xf32>
    %cst_3 = arith.constant 0.000000e+00 : f32
    %16 = vector.broadcast %cst_3 : f32 to vector<8x128xf32>
    %17 = arith.maximumf %15, %16 : vector<8x128xf32>
    %c2 = arith.constant 2 : index
    %18 = memref.load %arg1[%c2] : memref<109xf32, #tpu.memory_space<smem>>
    %19 = vector.broadcast %18 : f32 to vector<8x128xf32>
    %20 = arith.mulf %1, %19 : vector<8x128xf32>
    %c14 = arith.constant 14 : index
    %21 = memref.load %arg1[%c14] : memref<109xf32, #tpu.memory_space<smem>>
    %22 = vector.broadcast %21 : f32 to vector<8x128xf32>
    %23 = arith.addf %20, %22 : vector<8x128xf32>
    %cst_4 = arith.constant 0.000000e+00 : f32
    %24 = vector.broadcast %cst_4 : f32 to vector<8x128xf32>
    %25 = arith.maximumf %23, %24 : vector<8x128xf32>
    %c3 = arith.constant 3 : index
    %26 = memref.load %arg1[%c3] : memref<109xf32, #tpu.memory_space<smem>>
    %27 = vector.broadcast %26 : f32 to vector<8x128xf32>
    %28 = arith.mulf %1, %27 : vector<8x128xf32>
    %c15 = arith.constant 15 : index
    %29 = memref.load %arg1[%c15] : memref<109xf32, #tpu.memory_space<smem>>
    %30 = vector.broadcast %29 : f32 to vector<8x128xf32>
    %31 = arith.addf %28, %30 : vector<8x128xf32>
    %cst_5 = arith.constant 0.000000e+00 : f32
    %32 = vector.broadcast %cst_5 : f32 to vector<8x128xf32>
    %33 = arith.maximumf %31, %32 : vector<8x128xf32>
    %c4 = arith.constant 4 : index
    %34 = memref.load %arg1[%c4] : memref<109xf32, #tpu.memory_space<smem>>
    %35 = vector.broadcast %34 : f32 to vector<8x128xf32>
    %36 = arith.mulf %1, %35 : vector<8x128xf32>
    %c16 = arith.constant 16 : index
    %37 = memref.load %arg1[%c16] : memref<109xf32, #tpu.memory_space<smem>>
    %38 = vector.broadcast %37 : f32 to vector<8x128xf32>
    %39 = arith.addf %36, %38 : vector<8x128xf32>
    %cst_6 = arith.constant 0.000000e+00 : f32
    %40 = vector.broadcast %cst_6 : f32 to vector<8x128xf32>
    %41 = arith.maximumf %39, %40 : vector<8x128xf32>
    %c5 = arith.constant 5 : index
    %42 = memref.load %arg1[%c5] : memref<109xf32, #tpu.memory_space<smem>>
    %43 = vector.broadcast %42 : f32 to vector<8x128xf32>
    %44 = arith.mulf %1, %43 : vector<8x128xf32>
    %c17 = arith.constant 17 : index
    %45 = memref.load %arg1[%c17] : memref<109xf32, #tpu.memory_space<smem>>
    %46 = vector.broadcast %45 : f32 to vector<8x128xf32>
    %47 = arith.addf %44, %46 : vector<8x128xf32>
    %cst_7 = arith.constant 0.000000e+00 : f32
    %48 = vector.broadcast %cst_7 : f32 to vector<8x128xf32>
    %49 = arith.maximumf %47, %48 : vector<8x128xf32>
    %c6 = arith.constant 6 : index
    %50 = memref.load %arg1[%c6] : memref<109xf32, #tpu.memory_space<smem>>
    %51 = vector.broadcast %50 : f32 to vector<8x128xf32>
    %52 = arith.mulf %1, %51 : vector<8x128xf32>
    %c18 = arith.constant 18 : index
    %53 = memref.load %arg1[%c18] : memref<109xf32, #tpu.memory_space<smem>>
    %54 = vector.broadcast %53 : f32 to vector<8x128xf32>
    %55 = arith.addf %52, %54 : vector<8x128xf32>
    %cst_8 = arith.constant 0.000000e+00 : f32
    %56 = vector.broadcast %cst_8 : f32 to vector<8x128xf32>
    %57 = arith.maximumf %55, %56 : vector<8x128xf32>
    %c7 = arith.constant 7 : index
    %58 = memref.load %arg1[%c7] : memref<109xf32, #tpu.memory_space<smem>>
    %59 = vector.broadcast %58 : f32 to vector<8x128xf32>
    %60 = arith.mulf %1, %59 : vector<8x128xf32>
    %c19 = arith.constant 19 : index
    %61 = memref.load %arg1[%c19] : memref<109xf32, #tpu.memory_space<smem>>
    %62 = vector.broadcast %61 : f32 to vector<8x128xf32>
    %63 = arith.addf %60, %62 : vector<8x128xf32>
    %cst_9 = arith.constant 0.000000e+00 : f32
    %64 = vector.broadcast %cst_9 : f32 to vector<8x128xf32>
    %65 = arith.maximumf %63, %64 : vector<8x128xf32>
    %c8 = arith.constant 8 : index
    %66 = memref.load %arg1[%c8] : memref<109xf32, #tpu.memory_space<smem>>
    %67 = vector.broadcast %66 : f32 to vector<8x128xf32>
    %68 = arith.mulf %1, %67 : vector<8x128xf32>
    %c20 = arith.constant 20 : index
    %69 = memref.load %arg1[%c20] : memref<109xf32, #tpu.memory_space<smem>>
    %70 = vector.broadcast %69 : f32 to vector<8x128xf32>
    %71 = arith.addf %68, %70 : vector<8x128xf32>
    %cst_10 = arith.constant 0.000000e+00 : f32
    %72 = vector.broadcast %cst_10 : f32 to vector<8x128xf32>
    %73 = arith.maximumf %71, %72 : vector<8x128xf32>
    %c9 = arith.constant 9 : index
    %74 = memref.load %arg1[%c9] : memref<109xf32, #tpu.memory_space<smem>>
    %75 = vector.broadcast %74 : f32 to vector<8x128xf32>
    %76 = arith.mulf %1, %75 : vector<8x128xf32>
    %c21 = arith.constant 21 : index
    %77 = memref.load %arg1[%c21] : memref<109xf32, #tpu.memory_space<smem>>
    %78 = vector.broadcast %77 : f32 to vector<8x128xf32>
    %79 = arith.addf %76, %78 : vector<8x128xf32>
    %cst_11 = arith.constant 0.000000e+00 : f32
    %80 = vector.broadcast %cst_11 : f32 to vector<8x128xf32>
    %81 = arith.maximumf %79, %80 : vector<8x128xf32>
    %c10 = arith.constant 10 : index
    %82 = memref.load %arg1[%c10] : memref<109xf32, #tpu.memory_space<smem>>
    %83 = vector.broadcast %82 : f32 to vector<8x128xf32>
    %84 = arith.mulf %1, %83 : vector<8x128xf32>
    %c22 = arith.constant 22 : index
    %85 = memref.load %arg1[%c22] : memref<109xf32, #tpu.memory_space<smem>>
    %86 = vector.broadcast %85 : f32 to vector<8x128xf32>
    %87 = arith.addf %84, %86 : vector<8x128xf32>
    %cst_12 = arith.constant 0.000000e+00 : f32
    %88 = vector.broadcast %cst_12 : f32 to vector<8x128xf32>
    %89 = arith.maximumf %87, %88 : vector<8x128xf32>
    %c11 = arith.constant 11 : index
    %90 = memref.load %arg1[%c11] : memref<109xf32, #tpu.memory_space<smem>>
    %91 = vector.broadcast %90 : f32 to vector<8x128xf32>
    %92 = arith.mulf %1, %91 : vector<8x128xf32>
    %c23 = arith.constant 23 : index
    %93 = memref.load %arg1[%c23] : memref<109xf32, #tpu.memory_space<smem>>
    %94 = vector.broadcast %93 : f32 to vector<8x128xf32>
    %95 = arith.addf %92, %94 : vector<8x128xf32>
    %cst_13 = arith.constant 0.000000e+00 : f32
    %96 = vector.broadcast %cst_13 : f32 to vector<8x128xf32>
    %97 = arith.maximumf %95, %96 : vector<8x128xf32>
    %c24 = arith.constant 24 : index
    %98 = memref.load %arg1[%c24] : memref<109xf32, #tpu.memory_space<smem>>
    %99 = vector.broadcast %98 : f32 to vector<8x128xf32>
    %100 = arith.mulf %9, %99 : vector<8x128xf32>
    %c30 = arith.constant 30 : index
    %101 = memref.load %arg1[%c30] : memref<109xf32, #tpu.memory_space<smem>>
    %102 = vector.broadcast %101 : f32 to vector<8x128xf32>
    %103 = arith.mulf %17, %102 : vector<8x128xf32>
    %104 = arith.addf %100, %103 : vector<8x128xf32>
    %c36 = arith.constant 36 : index
    %105 = memref.load %arg1[%c36] : memref<109xf32, #tpu.memory_space<smem>>
    %106 = vector.broadcast %105 : f32 to vector<8x128xf32>
    %107 = arith.mulf %25, %106 : vector<8x128xf32>
    %108 = arith.addf %104, %107 : vector<8x128xf32>
    %c42 = arith.constant 42 : index
    %109 = memref.load %arg1[%c42] : memref<109xf32, #tpu.memory_space<smem>>
    %110 = vector.broadcast %109 : f32 to vector<8x128xf32>
    %111 = arith.mulf %33, %110 : vector<8x128xf32>
    %112 = arith.addf %108, %111 : vector<8x128xf32>
    %c48 = arith.constant 48 : index
    %113 = memref.load %arg1[%c48] : memref<109xf32, #tpu.memory_space<smem>>
    %114 = vector.broadcast %113 : f32 to vector<8x128xf32>
    %115 = arith.mulf %41, %114 : vector<8x128xf32>
    %116 = arith.addf %112, %115 : vector<8x128xf32>
    %c54 = arith.constant 54 : index
    %117 = memref.load %arg1[%c54] : memref<109xf32, #tpu.memory_space<smem>>
    %118 = vector.broadcast %117 : f32 to vector<8x128xf32>
    %119 = arith.mulf %49, %118 : vector<8x128xf32>
    %120 = arith.addf %116, %119 : vector<8x128xf32>
    %c60 = arith.constant 60 : index
    %121 = memref.load %arg1[%c60] : memref<109xf32, #tpu.memory_space<smem>>
    %122 = vector.broadcast %121 : f32 to vector<8x128xf32>
    %123 = arith.mulf %57, %122 : vector<8x128xf32>
    %124 = arith.addf %120, %123 : vector<8x128xf32>
    %c66 = arith.constant 66 : index
    %125 = memref.load %arg1[%c66] : memref<109xf32, #tpu.memory_space<smem>>
    %126 = vector.broadcast %125 : f32 to vector<8x128xf32>
    %127 = arith.mulf %65, %126 : vector<8x128xf32>
    %128 = arith.addf %124, %127 : vector<8x128xf32>
    %c72 = arith.constant 72 : index
    %129 = memref.load %arg1[%c72] : memref<109xf32, #tpu.memory_space<smem>>
    %130 = vector.broadcast %129 : f32 to vector<8x128xf32>
    %131 = arith.mulf %73, %130 : vector<8x128xf32>
    %132 = arith.addf %128, %131 : vector<8x128xf32>
    %c78 = arith.constant 78 : index
    %133 = memref.load %arg1[%c78] : memref<109xf32, #tpu.memory_space<smem>>
    %134 = vector.broadcast %133 : f32 to vector<8x128xf32>
    %135 = arith.mulf %81, %134 : vector<8x128xf32>
    %136 = arith.addf %132, %135 : vector<8x128xf32>
    %c84 = arith.constant 84 : index
    %137 = memref.load %arg1[%c84] : memref<109xf32, #tpu.memory_space<smem>>
    %138 = vector.broadcast %137 : f32 to vector<8x128xf32>
    %139 = arith.mulf %89, %138 : vector<8x128xf32>
    %140 = arith.addf %136, %139 : vector<8x128xf32>
    %c90 = arith.constant 90 : index
    %141 = memref.load %arg1[%c90] : memref<109xf32, #tpu.memory_space<smem>>
    %142 = vector.broadcast %141 : f32 to vector<8x128xf32>
    %143 = arith.mulf %97, %142 : vector<8x128xf32>
    %144 = arith.addf %140, %143 : vector<8x128xf32>
    %c96 = arith.constant 96 : index
    %145 = memref.load %arg1[%c96] : memref<109xf32, #tpu.memory_space<smem>>
    %146 = vector.broadcast %145 : f32 to vector<8x128xf32>
    %147 = arith.addf %144, %146 : vector<8x128xf32>
    %cst_14 = arith.constant 0.000000e+00 : f32
    %148 = vector.broadcast %cst_14 : f32 to vector<8x128xf32>
    %149 = arith.maximumf %147, %148 : vector<8x128xf32>
    %c25 = arith.constant 25 : index
    %150 = memref.load %arg1[%c25] : memref<109xf32, #tpu.memory_space<smem>>
    %151 = vector.broadcast %150 : f32 to vector<8x128xf32>
    %152 = arith.mulf %9, %151 : vector<8x128xf32>
    %c31 = arith.constant 31 : index
    %153 = memref.load %arg1[%c31] : memref<109xf32, #tpu.memory_space<smem>>
    %154 = vector.broadcast %153 : f32 to vector<8x128xf32>
    %155 = arith.mulf %17, %154 : vector<8x128xf32>
    %156 = arith.addf %152, %155 : vector<8x128xf32>
    %c37 = arith.constant 37 : index
    %157 = memref.load %arg1[%c37] : memref<109xf32, #tpu.memory_space<smem>>
    %158 = vector.broadcast %157 : f32 to vector<8x128xf32>
    %159 = arith.mulf %25, %158 : vector<8x128xf32>
    %160 = arith.addf %156, %159 : vector<8x128xf32>
    %c43 = arith.constant 43 : index
    %161 = memref.load %arg1[%c43] : memref<109xf32, #tpu.memory_space<smem>>
    %162 = vector.broadcast %161 : f32 to vector<8x128xf32>
    %163 = arith.mulf %33, %162 : vector<8x128xf32>
    %164 = arith.addf %160, %163 : vector<8x128xf32>
    %c49 = arith.constant 49 : index
    %165 = memref.load %arg1[%c49] : memref<109xf32, #tpu.memory_space<smem>>
    %166 = vector.broadcast %165 : f32 to vector<8x128xf32>
    %167 = arith.mulf %41, %166 : vector<8x128xf32>
    %168 = arith.addf %164, %167 : vector<8x128xf32>
    %c55 = arith.constant 55 : index
    %169 = memref.load %arg1[%c55] : memref<109xf32, #tpu.memory_space<smem>>
    %170 = vector.broadcast %169 : f32 to vector<8x128xf32>
    %171 = arith.mulf %49, %170 : vector<8x128xf32>
    %172 = arith.addf %168, %171 : vector<8x128xf32>
    %c61 = arith.constant 61 : index
    %173 = memref.load %arg1[%c61] : memref<109xf32, #tpu.memory_space<smem>>
    %174 = vector.broadcast %173 : f32 to vector<8x128xf32>
    %175 = arith.mulf %57, %174 : vector<8x128xf32>
    %176 = arith.addf %172, %175 : vector<8x128xf32>
    %c67 = arith.constant 67 : index
    %177 = memref.load %arg1[%c67] : memref<109xf32, #tpu.memory_space<smem>>
    %178 = vector.broadcast %177 : f32 to vector<8x128xf32>
    %179 = arith.mulf %65, %178 : vector<8x128xf32>
    %180 = arith.addf %176, %179 : vector<8x128xf32>
    %c73 = arith.constant 73 : index
    %181 = memref.load %arg1[%c73] : memref<109xf32, #tpu.memory_space<smem>>
    %182 = vector.broadcast %181 : f32 to vector<8x128xf32>
    %183 = arith.mulf %73, %182 : vector<8x128xf32>
    %184 = arith.addf %180, %183 : vector<8x128xf32>
    %c79 = arith.constant 79 : index
    %185 = memref.load %arg1[%c79] : memref<109xf32, #tpu.memory_space<smem>>
    %186 = vector.broadcast %185 : f32 to vector<8x128xf32>
    %187 = arith.mulf %81, %186 : vector<8x128xf32>
    %188 = arith.addf %184, %187 : vector<8x128xf32>
    %c85 = arith.constant 85 : index
    %189 = memref.load %arg1[%c85] : memref<109xf32, #tpu.memory_space<smem>>
    %190 = vector.broadcast %189 : f32 to vector<8x128xf32>
    %191 = arith.mulf %89, %190 : vector<8x128xf32>
    %192 = arith.addf %188, %191 : vector<8x128xf32>
    %c91 = arith.constant 91 : index
    %193 = memref.load %arg1[%c91] : memref<109xf32, #tpu.memory_space<smem>>
    %194 = vector.broadcast %193 : f32 to vector<8x128xf32>
    %195 = arith.mulf %97, %194 : vector<8x128xf32>
    %196 = arith.addf %192, %195 : vector<8x128xf32>
    %c97 = arith.constant 97 : index
    %197 = memref.load %arg1[%c97] : memref<109xf32, #tpu.memory_space<smem>>
    %198 = vector.broadcast %197 : f32 to vector<8x128xf32>
    %199 = arith.addf %196, %198 : vector<8x128xf32>
    %cst_15 = arith.constant 0.000000e+00 : f32
    %200 = vector.broadcast %cst_15 : f32 to vector<8x128xf32>
    %201 = arith.maximumf %199, %200 : vector<8x128xf32>
    %c26 = arith.constant 26 : index
    %202 = memref.load %arg1[%c26] : memref<109xf32, #tpu.memory_space<smem>>
    %203 = vector.broadcast %202 : f32 to vector<8x128xf32>
    %204 = arith.mulf %9, %203 : vector<8x128xf32>
    %c32 = arith.constant 32 : index
    %205 = memref.load %arg1[%c32] : memref<109xf32, #tpu.memory_space<smem>>
    %206 = vector.broadcast %205 : f32 to vector<8x128xf32>
    %207 = arith.mulf %17, %206 : vector<8x128xf32>
    %208 = arith.addf %204, %207 : vector<8x128xf32>
    %c38 = arith.constant 38 : index
    %209 = memref.load %arg1[%c38] : memref<109xf32, #tpu.memory_space<smem>>
    %210 = vector.broadcast %209 : f32 to vector<8x128xf32>
    %211 = arith.mulf %25, %210 : vector<8x128xf32>
    %212 = arith.addf %208, %211 : vector<8x128xf32>
    %c44 = arith.constant 44 : index
    %213 = memref.load %arg1[%c44] : memref<109xf32, #tpu.memory_space<smem>>
    %214 = vector.broadcast %213 : f32 to vector<8x128xf32>
    %215 = arith.mulf %33, %214 : vector<8x128xf32>
    %216 = arith.addf %212, %215 : vector<8x128xf32>
    %c50 = arith.constant 50 : index
    %217 = memref.load %arg1[%c50] : memref<109xf32, #tpu.memory_space<smem>>
    %218 = vector.broadcast %217 : f32 to vector<8x128xf32>
    %219 = arith.mulf %41, %218 : vector<8x128xf32>
    %220 = arith.addf %216, %219 : vector<8x128xf32>
    %c56 = arith.constant 56 : index
    %221 = memref.load %arg1[%c56] : memref<109xf32, #tpu.memory_space<smem>>
    %222 = vector.broadcast %221 : f32 to vector<8x128xf32>
    %223 = arith.mulf %49, %222 : vector<8x128xf32>
    %224 = arith.addf %220, %223 : vector<8x128xf32>
    %c62 = arith.constant 62 : index
    %225 = memref.load %arg1[%c62] : memref<109xf32, #tpu.memory_space<smem>>
    %226 = vector.broadcast %225 : f32 to vector<8x128xf32>
    %227 = arith.mulf %57, %226 : vector<8x128xf32>
    %228 = arith.addf %224, %227 : vector<8x128xf32>
    %c68 = arith.constant 68 : index
    %229 = memref.load %arg1[%c68] : memref<109xf32, #tpu.memory_space<smem>>
    %230 = vector.broadcast %229 : f32 to vector<8x128xf32>
    %231 = arith.mulf %65, %230 : vector<8x128xf32>
    %232 = arith.addf %228, %231 : vector<8x128xf32>
    %c74 = arith.constant 74 : index
    %233 = memref.load %arg1[%c74] : memref<109xf32, #tpu.memory_space<smem>>
    %234 = vector.broadcast %233 : f32 to vector<8x128xf32>
    %235 = arith.mulf %73, %234 : vector<8x128xf32>
    %236 = arith.addf %232, %235 : vector<8x128xf32>
    %c80 = arith.constant 80 : index
    %237 = memref.load %arg1[%c80] : memref<109xf32, #tpu.memory_space<smem>>
    %238 = vector.broadcast %237 : f32 to vector<8x128xf32>
    %239 = arith.mulf %81, %238 : vector<8x128xf32>
    %240 = arith.addf %236, %239 : vector<8x128xf32>
    %c86 = arith.constant 86 : index
    %241 = memref.load %arg1[%c86] : memref<109xf32, #tpu.memory_space<smem>>
    %242 = vector.broadcast %241 : f32 to vector<8x128xf32>
    %243 = arith.mulf %89, %242 : vector<8x128xf32>
    %244 = arith.addf %240, %243 : vector<8x128xf32>
    %c92 = arith.constant 92 : index
    %245 = memref.load %arg1[%c92] : memref<109xf32, #tpu.memory_space<smem>>
    %246 = vector.broadcast %245 : f32 to vector<8x128xf32>
    %247 = arith.mulf %97, %246 : vector<8x128xf32>
    %248 = arith.addf %244, %247 : vector<8x128xf32>
    %c98 = arith.constant 98 : index
    %249 = memref.load %arg1[%c98] : memref<109xf32, #tpu.memory_space<smem>>
    %250 = vector.broadcast %249 : f32 to vector<8x128xf32>
    %251 = arith.addf %248, %250 : vector<8x128xf32>
    %cst_16 = arith.constant 0.000000e+00 : f32
    %252 = vector.broadcast %cst_16 : f32 to vector<8x128xf32>
    %253 = arith.maximumf %251, %252 : vector<8x128xf32>
    %c27 = arith.constant 27 : index
    %254 = memref.load %arg1[%c27] : memref<109xf32, #tpu.memory_space<smem>>
    %255 = vector.broadcast %254 : f32 to vector<8x128xf32>
    %256 = arith.mulf %9, %255 : vector<8x128xf32>
    %c33 = arith.constant 33 : index
    %257 = memref.load %arg1[%c33] : memref<109xf32, #tpu.memory_space<smem>>
    %258 = vector.broadcast %257 : f32 to vector<8x128xf32>
    %259 = arith.mulf %17, %258 : vector<8x128xf32>
    %260 = arith.addf %256, %259 : vector<8x128xf32>
    %c39 = arith.constant 39 : index
    %261 = memref.load %arg1[%c39] : memref<109xf32, #tpu.memory_space<smem>>
    %262 = vector.broadcast %261 : f32 to vector<8x128xf32>
    %263 = arith.mulf %25, %262 : vector<8x128xf32>
    %264 = arith.addf %260, %263 : vector<8x128xf32>
    %c45 = arith.constant 45 : index
    %265 = memref.load %arg1[%c45] : memref<109xf32, #tpu.memory_space<smem>>
    %266 = vector.broadcast %265 : f32 to vector<8x128xf32>
    %267 = arith.mulf %33, %266 : vector<8x128xf32>
    %268 = arith.addf %264, %267 : vector<8x128xf32>
    %c51 = arith.constant 51 : index
    %269 = memref.load %arg1[%c51] : memref<109xf32, #tpu.memory_space<smem>>
    %270 = vector.broadcast %269 : f32 to vector<8x128xf32>
    %271 = arith.mulf %41, %270 : vector<8x128xf32>
    %272 = arith.addf %268, %271 : vector<8x128xf32>
    %c57 = arith.constant 57 : index
    %273 = memref.load %arg1[%c57] : memref<109xf32, #tpu.memory_space<smem>>
    %274 = vector.broadcast %273 : f32 to vector<8x128xf32>
    %275 = arith.mulf %49, %274 : vector<8x128xf32>
    %276 = arith.addf %272, %275 : vector<8x128xf32>
    %c63 = arith.constant 63 : index
    %277 = memref.load %arg1[%c63] : memref<109xf32, #tpu.memory_space<smem>>
    %278 = vector.broadcast %277 : f32 to vector<8x128xf32>
    %279 = arith.mulf %57, %278 : vector<8x128xf32>
    %280 = arith.addf %276, %279 : vector<8x128xf32>
    %c69 = arith.constant 69 : index
    %281 = memref.load %arg1[%c69] : memref<109xf32, #tpu.memory_space<smem>>
    %282 = vector.broadcast %281 : f32 to vector<8x128xf32>
    %283 = arith.mulf %65, %282 : vector<8x128xf32>
    %284 = arith.addf %280, %283 : vector<8x128xf32>
    %c75 = arith.constant 75 : index
    %285 = memref.load %arg1[%c75] : memref<109xf32, #tpu.memory_space<smem>>
    %286 = vector.broadcast %285 : f32 to vector<8x128xf32>
    %287 = arith.mulf %73, %286 : vector<8x128xf32>
    %288 = arith.addf %284, %287 : vector<8x128xf32>
    %c81 = arith.constant 81 : index
    %289 = memref.load %arg1[%c81] : memref<109xf32, #tpu.memory_space<smem>>
    %290 = vector.broadcast %289 : f32 to vector<8x128xf32>
    %291 = arith.mulf %81, %290 : vector<8x128xf32>
    %292 = arith.addf %288, %291 : vector<8x128xf32>
    %c87 = arith.constant 87 : index
    %293 = memref.load %arg1[%c87] : memref<109xf32, #tpu.memory_space<smem>>
    %294 = vector.broadcast %293 : f32 to vector<8x128xf32>
    %295 = arith.mulf %89, %294 : vector<8x128xf32>
    %296 = arith.addf %292, %295 : vector<8x128xf32>
    %c93 = arith.constant 93 : index
    %297 = memref.load %arg1[%c93] : memref<109xf32, #tpu.memory_space<smem>>
    %298 = vector.broadcast %297 : f32 to vector<8x128xf32>
    %299 = arith.mulf %97, %298 : vector<8x128xf32>
    %300 = arith.addf %296, %299 : vector<8x128xf32>
    %c99 = arith.constant 99 : index
    %301 = memref.load %arg1[%c99] : memref<109xf32, #tpu.memory_space<smem>>
    %302 = vector.broadcast %301 : f32 to vector<8x128xf32>
    %303 = arith.addf %300, %302 : vector<8x128xf32>
    %cst_17 = arith.constant 0.000000e+00 : f32
    %304 = vector.broadcast %cst_17 : f32 to vector<8x128xf32>
    %305 = arith.maximumf %303, %304 : vector<8x128xf32>
    %c28 = arith.constant 28 : index
    %306 = memref.load %arg1[%c28] : memref<109xf32, #tpu.memory_space<smem>>
    %307 = vector.broadcast %306 : f32 to vector<8x128xf32>
    %308 = arith.mulf %9, %307 : vector<8x128xf32>
    %c34 = arith.constant 34 : index
    %309 = memref.load %arg1[%c34] : memref<109xf32, #tpu.memory_space<smem>>
    %310 = vector.broadcast %309 : f32 to vector<8x128xf32>
    %311 = arith.mulf %17, %310 : vector<8x128xf32>
    %312 = arith.addf %308, %311 : vector<8x128xf32>
    %c40 = arith.constant 40 : index
    %313 = memref.load %arg1[%c40] : memref<109xf32, #tpu.memory_space<smem>>
    %314 = vector.broadcast %313 : f32 to vector<8x128xf32>
    %315 = arith.mulf %25, %314 : vector<8x128xf32>
    %316 = arith.addf %312, %315 : vector<8x128xf32>
    %c46 = arith.constant 46 : index
    %317 = memref.load %arg1[%c46] : memref<109xf32, #tpu.memory_space<smem>>
    %318 = vector.broadcast %317 : f32 to vector<8x128xf32>
    %319 = arith.mulf %33, %318 : vector<8x128xf32>
    %320 = arith.addf %316, %319 : vector<8x128xf32>
    %c52 = arith.constant 52 : index
    %321 = memref.load %arg1[%c52] : memref<109xf32, #tpu.memory_space<smem>>
    %322 = vector.broadcast %321 : f32 to vector<8x128xf32>
    %323 = arith.mulf %41, %322 : vector<8x128xf32>
    %324 = arith.addf %320, %323 : vector<8x128xf32>
    %c58 = arith.constant 58 : index
    %325 = memref.load %arg1[%c58] : memref<109xf32, #tpu.memory_space<smem>>
    %326 = vector.broadcast %325 : f32 to vector<8x128xf32>
    %327 = arith.mulf %49, %326 : vector<8x128xf32>
    %328 = arith.addf %324, %327 : vector<8x128xf32>
    %c64 = arith.constant 64 : index
    %329 = memref.load %arg1[%c64] : memref<109xf32, #tpu.memory_space<smem>>
    %330 = vector.broadcast %329 : f32 to vector<8x128xf32>
    %331 = arith.mulf %57, %330 : vector<8x128xf32>
    %332 = arith.addf %328, %331 : vector<8x128xf32>
    %c70 = arith.constant 70 : index
    %333 = memref.load %arg1[%c70] : memref<109xf32, #tpu.memory_space<smem>>
    %334 = vector.broadcast %333 : f32 to vector<8x128xf32>
    %335 = arith.mulf %65, %334 : vector<8x128xf32>
    %336 = arith.addf %332, %335 : vector<8x128xf32>
    %c76 = arith.constant 76 : index
    %337 = memref.load %arg1[%c76] : memref<109xf32, #tpu.memory_space<smem>>
    %338 = vector.broadcast %337 : f32 to vector<8x128xf32>
    %339 = arith.mulf %73, %338 : vector<8x128xf32>
    %340 = arith.addf %336, %339 : vector<8x128xf32>
    %c82 = arith.constant 82 : index
    %341 = memref.load %arg1[%c82] : memref<109xf32, #tpu.memory_space<smem>>
    %342 = vector.broadcast %341 : f32 to vector<8x128xf32>
    %343 = arith.mulf %81, %342 : vector<8x128xf32>
    %344 = arith.addf %340, %343 : vector<8x128xf32>
    %c88 = arith.constant 88 : index
    %345 = memref.load %arg1[%c88] : memref<109xf32, #tpu.memory_space<smem>>
    %346 = vector.broadcast %345 : f32 to vector<8x128xf32>
    %347 = arith.mulf %89, %346 : vector<8x128xf32>
    %348 = arith.addf %344, %347 : vector<8x128xf32>
    %c94 = arith.constant 94 : index
    %349 = memref.load %arg1[%c94] : memref<109xf32, #tpu.memory_space<smem>>
    %350 = vector.broadcast %349 : f32 to vector<8x128xf32>
    %351 = arith.mulf %97, %350 : vector<8x128xf32>
    %352 = arith.addf %348, %351 : vector<8x128xf32>
    %c100 = arith.constant 100 : index
    %353 = memref.load %arg1[%c100] : memref<109xf32, #tpu.memory_space<smem>>
    %354 = vector.broadcast %353 : f32 to vector<8x128xf32>
    %355 = arith.addf %352, %354 : vector<8x128xf32>
    %cst_18 = arith.constant 0.000000e+00 : f32
    %356 = vector.broadcast %cst_18 : f32 to vector<8x128xf32>
    %357 = arith.maximumf %355, %356 : vector<8x128xf32>
    %c29 = arith.constant 29 : index
    %358 = memref.load %arg1[%c29] : memref<109xf32, #tpu.memory_space<smem>>
    %359 = vector.broadcast %358 : f32 to vector<8x128xf32>
    %360 = arith.mulf %9, %359 : vector<8x128xf32>
    %c35 = arith.constant 35 : index
    %361 = memref.load %arg1[%c35] : memref<109xf32, #tpu.memory_space<smem>>
    %362 = vector.broadcast %361 : f32 to vector<8x128xf32>
    %363 = arith.mulf %17, %362 : vector<8x128xf32>
    %364 = arith.addf %360, %363 : vector<8x128xf32>
    %c41 = arith.constant 41 : index
    %365 = memref.load %arg1[%c41] : memref<109xf32, #tpu.memory_space<smem>>
    %366 = vector.broadcast %365 : f32 to vector<8x128xf32>
    %367 = arith.mulf %25, %366 : vector<8x128xf32>
    %368 = arith.addf %364, %367 : vector<8x128xf32>
    %c47 = arith.constant 47 : index
    %369 = memref.load %arg1[%c47] : memref<109xf32, #tpu.memory_space<smem>>
    %370 = vector.broadcast %369 : f32 to vector<8x128xf32>
    %371 = arith.mulf %33, %370 : vector<8x128xf32>
    %372 = arith.addf %368, %371 : vector<8x128xf32>
    %c53 = arith.constant 53 : index
    %373 = memref.load %arg1[%c53] : memref<109xf32, #tpu.memory_space<smem>>
    %374 = vector.broadcast %373 : f32 to vector<8x128xf32>
    %375 = arith.mulf %41, %374 : vector<8x128xf32>
    %376 = arith.addf %372, %375 : vector<8x128xf32>
    %c59 = arith.constant 59 : index
    %377 = memref.load %arg1[%c59] : memref<109xf32, #tpu.memory_space<smem>>
    %378 = vector.broadcast %377 : f32 to vector<8x128xf32>
    %379 = arith.mulf %49, %378 : vector<8x128xf32>
    %380 = arith.addf %376, %379 : vector<8x128xf32>
    %c65 = arith.constant 65 : index
    %381 = memref.load %arg1[%c65] : memref<109xf32, #tpu.memory_space<smem>>
    %382 = vector.broadcast %381 : f32 to vector<8x128xf32>
    %383 = arith.mulf %57, %382 : vector<8x128xf32>
    %384 = arith.addf %380, %383 : vector<8x128xf32>
    %c71 = arith.constant 71 : index
    %385 = memref.load %arg1[%c71] : memref<109xf32, #tpu.memory_space<smem>>
    %386 = vector.broadcast %385 : f32 to vector<8x128xf32>
    %387 = arith.mulf %65, %386 : vector<8x128xf32>
    %388 = arith.addf %384, %387 : vector<8x128xf32>
    %c77 = arith.constant 77 : index
    %389 = memref.load %arg1[%c77] : memref<109xf32, #tpu.memory_space<smem>>
    %390 = vector.broadcast %389 : f32 to vector<8x128xf32>
    %391 = arith.mulf %73, %390 : vector<8x128xf32>
    %392 = arith.addf %388, %391 : vector<8x128xf32>
    %c83 = arith.constant 83 : index
    %393 = memref.load %arg1[%c83] : memref<109xf32, #tpu.memory_space<smem>>
    %394 = vector.broadcast %393 : f32 to vector<8x128xf32>
    %395 = arith.mulf %81, %394 : vector<8x128xf32>
    %396 = arith.addf %392, %395 : vector<8x128xf32>
    %c89 = arith.constant 89 : index
    %397 = memref.load %arg1[%c89] : memref<109xf32, #tpu.memory_space<smem>>
    %398 = vector.broadcast %397 : f32 to vector<8x128xf32>
    %399 = arith.mulf %89, %398 : vector<8x128xf32>
    %400 = arith.addf %396, %399 : vector<8x128xf32>
    %c95 = arith.constant 95 : index
    %401 = memref.load %arg1[%c95] : memref<109xf32, #tpu.memory_space<smem>>
    %402 = vector.broadcast %401 : f32 to vector<8x128xf32>
    %403 = arith.mulf %97, %402 : vector<8x128xf32>
    %404 = arith.addf %400, %403 : vector<8x128xf32>
    %c101 = arith.constant 101 : index
    %405 = memref.load %arg1[%c101] : memref<109xf32, #tpu.memory_space<smem>>
    %406 = vector.broadcast %405 : f32 to vector<8x128xf32>
    %407 = arith.addf %404, %406 : vector<8x128xf32>
    %cst_19 = arith.constant 0.000000e+00 : f32
    %408 = vector.broadcast %cst_19 : f32 to vector<8x128xf32>
    %409 = arith.maximumf %407, %408 : vector<8x128xf32>
    %c102 = arith.constant 102 : index
    %410 = memref.load %arg1[%c102] : memref<109xf32, #tpu.memory_space<smem>>
    %411 = vector.broadcast %410 : f32 to vector<8x128xf32>
    %412 = arith.mulf %149, %411 : vector<8x128xf32>
    %c103 = arith.constant 103 : index
    %413 = memref.load %arg1[%c103] : memref<109xf32, #tpu.memory_space<smem>>
    %414 = vector.broadcast %413 : f32 to vector<8x128xf32>
    %415 = arith.mulf %201, %414 : vector<8x128xf32>
    %416 = arith.addf %412, %415 : vector<8x128xf32>
    %c104 = arith.constant 104 : index
    %417 = memref.load %arg1[%c104] : memref<109xf32, #tpu.memory_space<smem>>
    %418 = vector.broadcast %417 : f32 to vector<8x128xf32>
    %419 = arith.mulf %253, %418 : vector<8x128xf32>
    %420 = arith.addf %416, %419 : vector<8x128xf32>
    %c105 = arith.constant 105 : index
    %421 = memref.load %arg1[%c105] : memref<109xf32, #tpu.memory_space<smem>>
    %422 = vector.broadcast %421 : f32 to vector<8x128xf32>
    %423 = arith.mulf %305, %422 : vector<8x128xf32>
    %424 = arith.addf %420, %423 : vector<8x128xf32>
    %c106 = arith.constant 106 : index
    %425 = memref.load %arg1[%c106] : memref<109xf32, #tpu.memory_space<smem>>
    %426 = vector.broadcast %425 : f32 to vector<8x128xf32>
    %427 = arith.mulf %357, %426 : vector<8x128xf32>
    %428 = arith.addf %424, %427 : vector<8x128xf32>
    %c107 = arith.constant 107 : index
    %429 = memref.load %arg1[%c107] : memref<109xf32, #tpu.memory_space<smem>>
    %430 = vector.broadcast %429 : f32 to vector<8x128xf32>
    %431 = arith.mulf %409, %430 : vector<8x128xf32>
    %432 = arith.addf %428, %431 : vector<8x128xf32>
    %c108 = arith.constant 108 : index
    %433 = memref.load %arg1[%c108] : memref<109xf32, #tpu.memory_space<smem>>
    %434 = vector.broadcast %433 : f32 to vector<8x128xf32>
    %435 = arith.addf %432, %434 : vector<8x128xf32>
    %c0_20 = arith.constant 0 : index
    %c0_21 = arith.constant 0 : index
    %c0_22 = arith.constant 0 : index
    %436 = vector.load %arg3[%c0_20, %c0_21, %c0_22] : memref<1x8x128xf32, #tpu.memory_space<vmem>>, vector<1x8x128xf32>
    %437 = vector.shape_cast %436 : vector<1x8x128xf32> to vector<8x128xf32>
    %438 = vector.shape_cast %435 : vector<8x128xf32> to vector<1x8x128xf32>
    tpu.vector_store %arg3[%c0_20, %c0_21, %c0_22], %438 {strides = array<i32>} : memref<1x8x128xf32, #tpu.memory_space<vmem>>, vector<1x8x128xf32>,
    return
  }
  func.func @transform_0(%arg0: i32) -> i32 {
    %c0_i32 = arith.constant 0 : i32
    %c0_i32_0 = arith.constant 0 : i32
    return %c0_i32 : i32
  }
  func.func @transform_1(%arg0: i32) -> (i32, i32, i32) {
    %c0_i32 = arith.constant 0 : i32
    %c0_i32_0 = arith.constant 0 : i32
    %c0_i32_1 = arith.constant 0 : i32
    return %c0_i32, %arg0, %c0_i32_0 : i32, i32, i32
  }
  func.func @transform_2(%arg0: i32) -> (i32, i32, i32) {
    %c0_i32 = arith.constant 0 : i32
    %c0_i32_0 = arith.constant 0 : i32
    %c0_i32_1 = arith.constant 0 : i32
    return %c0_i32, %arg0, %c0_i32_0 : i32, i32, i32
  }
}

</mosaic_0001>

<llo_original>
// kernel: tpu_custom_call.1
$region0: #{tpu_custom_call.1}
  #allocation0 [shape = 'u32[]', space=smem, size = 0x4, offset = 0x4, fixed_abs, tag = 'smem constant byte address 0x4 - core index']
  #allocation1 [shape = 'u32[144,128]{1,0:T(1,128)}', space=vmem, size = 0x12000, scoped, tag = 'internal scratch']
  %s0 = inlined_call_operand.hbm [shape: f32[109], index: 0, kind: input, shape index: {}]
  %s1 = inlined_call_operand.hbm [shape: f32[1,16,128], index: 1, kind: input, shape index: {}]
  %s2 = inlined_call_operand.hbm [shape: f32[1,16,128], index: 2, kind: output, shape index: {}]
  %s3 = sld [smem:[#allocation0]]
  $region49: #{tpu_custom_call.1} parent=0
    _
  %s5 = ssub.s32 1, %s3
  %s6 = scalar_select 0, %s5, %s3
  $region1: #{tpu_custom_call.1} parent=0
    #allocation2 [shape = 'u8[512]{0}', space=smem, size = 0x200, scoped, tag = 'input window, operand 0, single buffered']
    #allocation3 [shape = 's32[2]{0}', space=sflag, size = 0x8, scoped, tag = 'scoped memory for tpu_custom_call.1']
    #allocation4 [shape = 's32[2]{0}', space=sflag, size = 0x8, scoped, tag = 'scoped memory for tpu_custom_call.1']
    #allocation5 [shape = 's32[2]{0}', space=sflag, size = 0x8, scoped, tag = 'scoped memory for tpu_custom_call.1']
    #allocation6 [shape = 'u8[8192]{0}', space=vmem, size = 0x2000, scoped, tag = 'input window, operand 1']
    #allocation7 [shape = 'u8[8192]{0}', space=vmem, size = 0x2000, scoped, tag = 'output window, operand 0']
    %7 = vsyncpa [#allocation5], 0
    %8 = vsyncpa [#allocation3], 0
    %s9 = scalar_lea.sflag [#allocation3], 1
    %10 = vsyncpa %s9, 0
    %11 = vsyncpa [#allocation4], 0
    %s12 = scalar_lea.sflag [#allocation4], 1
    %13 = vsyncpa %s12, 0
    loop: start=0, step=1, limit=4
    $region2: #{tpu_custom_call.1} parent=1 // loop_pre_header
      _
    $region3: #{tpu_custom_call.1} parent=1 // loop_header
      %s15 = sphi 0, %s19
      %p16 = scmp.ge.s32.totalorder %s15, 4
      %s23 = sphi 0, %s23
      %s25 = sphi 0, %s23
      %s26 = sphi 0, %s25
      %s40 = sphi 0, %s26
      %s46 = sphi 0, %s48
      %s49 = sphi 0, %s46
      %s50 = sphi 0, %s49
      %s66 = sphi 0, %s50
      %s72 = sphi 0, %s74
      %s75 = sphi 0, %s72
      %s76 = sphi 0, %s75
      %s92 = sphi 0, %s76
    $region4: #{tpu_custom_call.1} parent=1 // loop_header_branch
      %18 = sbr.rel (%p16) target = $region8
    $region5: #{tpu_custom_call.1} parent=1 // loop_body
      %s20 = ssub.s32 %s15, 1
      %s21 = ssub.s32 %s15, 2
      %s22 = sadd.s32 %s15, 1
      %s24 = sadd.s32 %s23, 1
      %p27 = scmp.eq.s32.totalorder %s15, 1
      %p28 = scmp.ne.s32.totalorder %s23, %s25
      %p29 = scmp.eq.s32.totalorder %s15, 0
      %p30 = por %p28, %p29
      %p31 = scmp.ne.s32.totalorder %s23, %s25
      %p32 = scmp.eq.s32.totalorder %s20, 1
      %p33 = por %p31, %p32
      %p34 = scmp.ne.s32.totalorder %s25, %s26
      %p35 = scmp.eq.s32.totalorder %s20, 0
      %p36 = por %p34, %p35
      %p37 = scmp.ne.s32.totalorder %s25, %s26
      %p38 = scmp.eq.s32.totalorder %s21, 1
      %p39 = por %p37, %p38
      %p41 = scmp.ne.s32.totalorder %s26, %s40
      %p42 = scmp.eq.s32.totalorder %s21, 0
      %p43 = por %p41, %p42
      %s44 = ssub.s32 %s15, %s22
      %p45 = scmp.eq.s32.totalorder %s44, 0
      %s47 = sadd.s32 %s46, 1
      %s48 = scalar_select %p45, %s46, %s47
      %p51 = pneg %p45
      %p52 = scmp.eq.s32.totalorder %s15, 1
      %p53 = por %p51, %p52
      %p54 = scmp.ne.s32.totalorder %s46, %s49
      %p55 = scmp.eq.s32.totalorder %s15, 0
      %p56 = por %p54, %p55
      %p57 = scmp.ne.s32.totalorder %s46, %s49
      %p58 = scmp.eq.s32.totalorder %s20, 1
      %p59 = por %p57, %p58
      %p60 = scmp.ne.s32.totalorder %s49, %s50
      %p61 = scmp.eq.s32.totalorder %s20, 0
      %p62 = por %p60, %p61
      %p63 = scmp.ne.s32.totalorder %s49, %s50
      %p64 = scmp.eq.s32.totalorder %s21, 1
      %p65 = por %p63, %p64
      %p67 = scmp.ne.s32.totalorder %s50, %s66
      %p68 = scmp.eq.s32.totalorder %s21, 0
      %p69 = por %p67, %p68
      %s70 = ssub.s32 %s15, %s22
      %p71 = scmp.eq.s32.totalorder %s70, 0
      %s73 = sadd.s32 %s72, 1
      %s74 = scalar_select %p71, %s72, %s73
      %p77 = pneg %p71
      %p78 = scmp.eq.s32.totalorder %s15, 1
      %p79 = por %p77, %p78
      %p80 = scmp.ne.s32.totalorder %s72, %s75
      %p81 = scmp.eq.s32.totalorder %s15, 0
      %p82 = por %p80, %p81
      %p83 = scmp.ne.s32.totalorder %s72, %s75
      %p84 = scmp.eq.s32.totalorder %s20, 1
      %p85 = por %p83, %p84
      %p86 = scmp.ne.s32.totalorder %s75, %s76
      %p87 = scmp.eq.s32.totalorder %s20, 0
      %p88 = por %p86, %p87
      %p89 = scmp.ne.s32.totalorder %s75, %s76
      %p90 = scmp.eq.s32.totalorder %s21, 1
      %p91 = por %p89, %p90
      %p93 = scmp.ne.s32.totalorder %s76, %s92
      %p94 = scmp.eq.s32.totalorder %s21, 0
      %p95 = por %p93, %p94
      %p96 = scmp.le.s32.totalorder 1, %s15
      %p97 = scmp.lt.s32.totalorder %s15, 3
      %p98 = pnand %p96, %p97
      %p99 = pneg %p98
      // Predicated region
      $region9: #{tpu_custom_call.1} parent=5 // pred_check
        _
      $region10: #{tpu_custom_call.1} parent=5 // pred_check_branch
        %101 = sbr.rel (%p98) target = $region12
      $region11: #{tpu_custom_call.1} parent=5 // pred_region
        %s102 = ssub.s32 %s15, 1
        // Predicated region
        $region13: #{tpu_custom_call.1} parent=11 // pred_check
          %p103 = pneg %p36
        $region14: #{tpu_custom_call.1} parent=11 // pred_check_branch
          %105 = sbr.rel (%p103) target = $region16
        $region15: #{tpu_custom_call.1} parent=11 // pred_region
          %s107 = ssub.s32 16, 16
          %108 = vsyncadd [#allocation5], %s107
          %111 = dma.hbm_to_smem %s0, 16, [#allocation2], [#allocation5]
        $region16: #{tpu_custom_call.1} parent=11 // pred_fallthru
          _
      $region12: #{tpu_custom_call.1} parent=5 // pred_fallthru
        _
      %p112 = scmp.lt.s32.totalorder %s15, 2
      // Predicated region
      $region17: #{tpu_custom_call.1} parent=5 // pred_check
        %p113 = pneg %p112
      $region18: #{tpu_custom_call.1} parent=5 // pred_check_branch
        %115 = sbr.rel (%p113) target = $region20
      $region19: #{tpu_custom_call.1} parent=5 // pred_region
        // Predicated region
        $region21: #{tpu_custom_call.1} parent=19 // pred_check
          %p116 = pneg %p56
        $region22: #{tpu_custom_call.1} parent=19 // pred_check_branch
          %118 = sbr.rel (%p116) target = $region24
        $region23: #{tpu_custom_call.1} parent=19 // pred_region
          %s119 = sand.u32 %s46, 1
          %s120 = scalar_lea.sflag [#allocation3], %s119
          %s121 = sand.u32 %s46, 1
          %s122 = smul.addr %s121, 8
          %s123 = scalar_lea.vmem [#allocation6], %s122
          %s125 = ssub.s32 128, 128
          %126 = vsyncadd %s120, %s125
          %s127 = smul.addr %s15, 128
          %s128 = scalar_lea.hbm %s1, %s127
          %s130 = sshll.u32 %s123, 4
          %s131 = int_to_ptr.vmem [resolvable:$true] %s130
          %133 = dma.hbm_to_vmem [thread:$0]  %s128, 128, %s131, %s120
        $region24: #{tpu_custom_call.1} parent=19 // pred_fallthru
          _
      $region20: #{tpu_custom_call.1} parent=5 // pred_fallthru
        _
      %p134 = scmp.le.s32.totalorder 1, %s15
      %p135 = scmp.lt.s32.totalorder %s15, 3
      %p136 = pnand %p134, %p135
      %p137 = pneg %p136
      // Predicated region
      $region25: #{tpu_custom_call.1} parent=5 // pred_check
        _
      $region26: #{tpu_custom_call.1} parent=5 // pred_check_branch
        %139 = sbr.rel (%p136) target = $region28
      $region27: #{tpu_custom_call.1} parent=5 // pred_region
        %s140 = ssub.s32 %s15, 1
        // Predicated region
        $region29: #{tpu_custom_call.1} parent=27 // pred_check
          %p141 = pneg %p36
        $region30: #{tpu_custom_call.1} parent=27 // pred_check_branch
          %143 = sbr.rel (%p141) target = $region32
        $region31: #{tpu_custom_call.1} parent=27 // pred_region
          %144 = dma.done [#allocation5], 16
        $region32: #{tpu_custom_call.1} parent=27 // pred_fallthru
          _
        %s145 = sand.u32 %s49, 1
        %s146 = scalar_lea.sflag [#allocation3], %s145
        %s147 = sand.u32 %s49, 1
        %s148 = smul.addr %s147, 8
        %s149 = scalar_lea.vmem [#allocation6], %s148
        // Predicated region
        $region33: #{tpu_custom_call.1} parent=27 // pred_check
          %p150 = pneg %p62
        $region34: #{tpu_custom_call.1} parent=27 // pred_check_branch
          %152 = sbr.rel (%p150) target = $region36
        $region35: #{tpu_custom_call.1} parent=27 // pred_region
          %153 = dma.done %s146, 128
        $region36: #{tpu_custom_call.1} parent=27 // pred_fallthru
          _
        %154 = sfence
        %p155 = pneg %p36
        %p156 = pneg %p33
        %s157 = sand.u32 %s49, 1
        %s158 = scalar_lea.sflag [#allocation3], %s157
        %s159 = sand.u32 %s49, 1
        %s160 = smul.addr %s159, 8
        %s161 = scalar_lea.vmem [#allocation6], %s160
        %p162 = pneg %p62
        %p163 = pneg %p59
        %p164 = pneg %p88
        %p165 = pneg %p85
        %s166 = sand.u32 %s75, 1
        %s167 = scalar_lea.sflag [#allocation4], %s166
        %s168 = sand.u32 %s75, 1
        %s169 = smul.addr %s168, 8
        %s170 = scalar_lea.vmem [#allocation7], %s169
        %v171 = vld [vmem:[%s149] sm:$0xff]
        %s172 = sld [smem:[#allocation2]]
        %v173 = vstv %s172
        %v174 = vmul.f32 %v171, %v173
        %s175 = sld [smem:[#allocation2 + $0xc]]
        %v176 = vstv %s175
        %v177 = vadd.f32 %v174, %v176
        %v178 = vmax.f32 %v177, 0.0
        %s179 = sld [smem:[#allocation2 + $0x1]]
        %v180 = vstv %s179
        %v181 = vmul.f32 %v171, %v180
        %s182 = sld [smem:[#allocation2 + $0xd]]
        %v183 = vstv %s182
        %v184 = vadd.f32 %v181, %v183
        %v185 = vmax.f32 %v184, 0.0
        %s186 = sld [smem:[#allocation2 + $0x2]]
        %v187 = vstv %s186
        %v188 = vmul.f32 %v171, %v187
        %s189 = sld [smem:[#allocation2 + $0xe]]
        %v190 = vstv %s189
        %v191 = vadd.f32 %v188, %v190
        %v192 = vmax.f32 %v191, 0.0
        %s193 = sld [smem:[#allocation2 + $0x3]]
        %v194 = vstv %s193
        %v195 = vmul.f32 %v171, %v194
        %s196 = sld [smem:[#allocation2 + $0xf]]
        %v197 = vstv %s196
        %v198 = vadd.f32 %v195, %v197
        %v199 = vmax.f32 %v198, 0.0
        %s200 = sld [smem:[#allocation2 + $0x4]]
        %v201 = vstv %s200
        %v202 = vmul.f32 %v171, %v201
        %s203 = sld [smem:[#allocation2 + $0x10]]
        %v204 = vstv %s203
        %v205 = vadd.f32 %v202, %v204
        %v206 = vmax.f32 %v205, 0.0
        %s207 = sld [smem:[#allocation2 + $0x5]]
        %v208 = vstv %s207
        %v209 = vmul.f32 %v171, %v208
        %s210 = sld [smem:[#allocation2 + $0x11]]
        %v211 = vstv %s210
        %v212 = vadd.f32 %v209, %v211
        %v213 = vmax.f32 %v212, 0.0
        %s214 = sld [smem:[#allocation2 + $0x6]]
        %v215 = vstv %s214
        %v216 = vmul.f32 %v171, %v215
        %s217 = sld [smem:[#allocation2 + $0x12]]
        %v218 = vstv %s217
        %v219 = vadd.f32 %v216, %v218
        %v220 = vmax.f32 %v219, 0.0
        %s221 = sld [smem:[#allocation2 + $0x7]]
        %v222 = vstv %s221
        %v223 = vmul.f32 %v171, %v222
        %s224 = sld [smem:[#allocation2 + $0x13]]
        %v225 = vstv %s224
        %v226 = vadd.f32 %v223, %v225
        %v227 = vmax.f32 %v226, 0.0
        %s228 = sld [smem:[#allocation2 + $0x8]]
        %v229 = vstv %s228
        %v230 = vmul.f32 %v171, %v229
        %s231 = sld [smem:[#allocation2 + $0x14]]
        %v232 = vstv %s231
        %v233 = vadd.f32 %v230, %v232
        %v234 = vmax.f32 %v233, 0.0
        %s235 = sld [smem:[#allocation2 + $0x9]]
        %v236 = vstv %s235
        %v237 = vmul.f32 %v171, %v236
        %s238 = sld [smem:[#allocation2 + $0x15]]
        %v239 = vstv %s238
        %v240 = vadd.f32 %v237, %v239
        %v241 = vmax.f32 %v240, 0.0
        %s242 = sld [smem:[#allocation2 + $0xa]]
        %v243 = vstv %s242
        %v244 = vmul.f32 %v171, %v243
        %s245 = sld [smem:[#allocation2 + $0x16]]
        %v246 = vstv %s245
        %v247 = vadd.f32 %v244, %v246
        %v248 = vmax.f32 %v247, 0.0
        %s249 = sld [smem:[#allocation2 + $0xb]]
        %v250 = vstv %s249
        %v251 = vmul.f32 %v171, %v250
        %s252 = sld [smem:[#allocation2 + $0x17]]
        %v253 = vstv %s252
        %v254 = vadd.f32 %v251, %v253
        %v255 = vmax.f32 %v254, 0.0
        %s256 = sld [smem:[#allocation2 + $0x18]]
        %v257 = vstv %s256
        %v258 = vmul.f32 %v178, %v257
        %s259 = sld [smem:[#allocation2 + $0x1e]]
        %v260 = vstv %s259
        %v261 = vmul.f32 %v185, %v260
        %v262 = vadd.f32 %v258, %v261
        %s263 = sld [smem:[#allocation2 + $0x24]]
        %v264 = vstv %s263
        %v265 = vmul.f32 %v192, %v264
        %v266 = vadd.f32 %v262, %v265
        %s267 = sld [smem:[#allocation2 + $0x2a]]
        %v268 = vstv %s267
        %v269 = vmul.f32 %v199, %v268
        %v270 = vadd.f32 %v266, %v269
        %s271 = sld [smem:[#allocation2 + $0x30]]
        %v272 = vstv %s271
        %v273 = vmul.f32 %v206, %v272
        %v274 = vadd.f32 %v270, %v273
        %s275 = sld [smem:[#allocation2 + $0x36]]
        %v276 = vstv %s275
        %v277 = vmul.f32 %v213, %v276
        %v278 = vadd.f32 %v274, %v277
        %s279 = sld [smem:[#allocation2 + $0x3c]]
        %v280 = vstv %s279
        %v281 = vmul.f32 %v220, %v280
        %v282 = vadd.f32 %v278, %v281
        %s283 = sld [smem:[#allocation2 + $0x42]]
        %v284 = vstv %s283
        %v285 = vmul.f32 %v227, %v284
        %v286 = vadd.f32 %v282, %v285
        %s287 = sld [smem:[#allocation2 + $0x48]]
        %v288 = vstv %s287
        %v289 = vmul.f32 %v234, %v288
        %v290 = vadd.f32 %v286, %v289
        %s291 = sld [smem:[#allocation2 + $0x4e]]
        %v292 = vstv %s291
        %v293 = vmul.f32 %v241, %v292
        %v294 = vadd.f32 %v290, %v293
        %s295 = sld [smem:[#allocation2 + $0x54]]
        %v296 = vstv %s295
        %v297 = vmul.f32 %v248, %v296
        %v298 = vadd.f32 %v294, %v297
        %s299 = sld [smem:[#allocation2 + $0x5a]]
        %v300 = vstv %s299
        %v301 = vmul.f32 %v255, %v300
        %v302 = vadd.f32 %v298, %v301
        %s303 = sld [smem:[#allocation2 + $0x60]]
        %v304 = vstv %s303
        %v305 = vadd.f32 %v302, %v304
        %v306 = vmax.f32 %v305, 0.0
        %s307 = sld [smem:[#allocation2 + $0x19]]
        %v308 = vstv %s307
        %v309 = vmul.f32 %v178, %v308
        %s310 = sld [smem:[#allocation2 + $0x1f]]
        %v311 = vstv %s310
        %v312 = vmul.f32 %v185, %v311
        %v313 = vadd.f32 %v309, %v312
        %s314 = sld [smem:[#allocation2 + $0x25]]
        %v315 = vstv %s314
        %v316 = vmul.f32 %v192, %v315
        %v317 = vadd.f32 %v313, %v316
        %s318 = sld [smem:[#allocation2 + $0x2b]]
        %v319 = vstv %s318
        %v320 = vmul.f32 %v199, %v319
        %v321 = vadd.f32 %v317, %v320
        %s322 = sld [smem:[#allocation2 + $0x31]]
        %v323 = vstv %s322
        %v324 = vmul.f32 %v206, %v323
        %v325 = vadd.f32 %v321, %v324
        %s326 = sld [smem:[#allocation2 + $0x37]]
        %v327 = vstv %s326
        %v328 = vmul.f32 %v213, %v327
        %v329 = vadd.f32 %v325, %v328
        %s330 = sld [smem:[#allocation2 + $0x3d]]
        %v331 = vstv %s330
        %v332 = vmul.f32 %v220, %v331
        %v333 = vadd.f32 %v329, %v332
        %s334 = sld [smem:[#allocation2 + $0x43]]
        %v335 = vstv %s334
        %v336 = vmul.f32 %v227, %v335
        %v337 = vadd.f32 %v333, %v336
        %s338 = sld [smem:[#allocation2 + $0x49]]
        %v339 = vstv %s338
        %v340 = vmul.f32 %v234, %v339
        %v341 = vadd.f32 %v337, %v340
        %s342 = sld [smem:[#allocation2 + $0x4f]]
        %v343 = vstv %s342
        %v344 = vmul.f32 %v241, %v343
        %v345 = vadd.f32 %v341, %v344
        %s346 = sld [smem:[#allocation2 + $0x55]]
        %v347 = vstv %s346
        %v348 = vmul.f32 %v248, %v347
        %v349 = vadd.f32 %v345, %v348
        %s350 = sld [smem:[#allocation2 + $0x5b]]
        %v351 = vstv %s350
        %v352 = vmul.f32 %v255, %v351
        %v353 = vadd.f32 %v349, %v352
        %s354 = sld [smem:[#allocation2 + $0x61]]
        %v355 = vstv %s354
        %v356 = vadd.f32 %v353, %v355
        %v357 = vmax.f32 %v356, 0.0
        %s358 = sld [smem:[#allocation2 + $0x1a]]
        %v359 = vstv %s358
        %v360 = vmul.f32 %v178, %v359
        %s361 = sld [smem:[#allocation2 + $0x20]]
        %v362 = vstv %s361
        %v363 = vmul.f32 %v185, %v362
        %v364 = vadd.f32 %v360, %v363
        %s365 = sld [smem:[#allocation2 + $0x26]]
        %v366 = vstv %s365
        %v367 = vmul.f32 %v192, %v366
        %v368 = vadd.f32 %v364, %v367
        %s369 = sld [smem:[#allocation2 + $0x2c]]
        %v370 = vstv %s369
        %v371 = vmul.f32 %v199, %v370
        %v372 = vadd.f32 %v368, %v371
        %s373 = sld [smem:[#allocation2 + $0x32]]
        %v374 = vstv %s373
        %v375 = vmul.f32 %v206, %v374
        %v376 = vadd.f32 %v372, %v375
        %s377 = sld [smem:[#allocation2 + $0x38]]
        %v378 = vstv %s377
        %v379 = vmul.f32 %v213, %v378
        %v380 = vadd.f32 %v376, %v379
        %s381 = sld [smem:[#allocation2 + $0x3e]]
        %v382 = vstv %s381
        %v383 = vmul.f32 %v220, %v382
        %v384 = vadd.f32 %v380, %v383
        %s385 = sld [smem:[#allocation2 + $0x44]]
        %v386 = vstv %s385
        %v387 = vmul.f32 %v227, %v386
        %v388 = vadd.f32 %v384, %v387
        %s389 = sld [smem:[#allocation2 + $0x4a]]
        %v390 = vstv %s389
        %v391 = vmul.f32 %v234, %v390
        %v392 = vadd.f32 %v388, %v391
        %s393 = sld [smem:[#allocation2 + $0x50]]
        %v394 = vstv %s393
        %v395 = vmul.f32 %v241, %v394
        %v396 = vadd.f32 %v392, %v395
        %s397 = sld [smem:[#allocation2 + $0x56]]
        %v398 = vstv %s397
        %v399 = vmul.f32 %v248, %v398
        %v400 = vadd.f32 %v396, %v399
        %s401 = sld [smem:[#allocation2 + $0x5c]]
        %v402 = vstv %s401
        %v403 = vmul.f32 %v255, %v402
        %v404 = vadd.f32 %v400, %v403
        %s405 = sld [smem:[#allocation2 + $0x62]]
        %v406 = vstv %s405
        %v407 = vadd.f32 %v404, %v406
        %v408 = vmax.f32 %v407, 0.0
        %s409 = sld [smem:[#allocation2 + $0x1b]]
        %v410 = vstv %s409
        %v411 = vmul.f32 %v178, %v410
        %s412 = sld [smem:[#allocation2 + $0x21]]
        %v413 = vstv %s412
        %v414 = vmul.f32 %v185, %v413
        %v415 = vadd.f32 %v411, %v414
        %s416 = sld [smem:[#allocation2 + $0x27]]
        %v417 = vstv %s416
        %v418 = vmul.f32 %v192, %v417
        %v419 = vadd.f32 %v415, %v418
        %s420 = sld [smem:[#allocation2 + $0x2d]]
        %v421 = vstv %s420
        %v422 = vmul.f32 %v199, %v421
        %v423 = vadd.f32 %v419, %v422
        %s424 = sld [smem:[#allocation2 + $0x33]]
        %v425 = vstv %s424
        %v426 = vmul.f32 %v206, %v425
        %v427 = vadd.f32 %v423, %v426
        %s428 = sld [smem:[#allocation2 + $0x39]]
        %v429 = vstv %s428
        %v430 = vmul.f32 %v213, %v429
        %v431 = vadd.f32 %v427, %v430
        %s432 = sld [smem:[#allocation2 + $0x3f]]
        %v433 = vstv %s432
        %v434 = vmul.f32 %v220, %v433
        %v435 = vadd.f32 %v431, %v434
        %s436 = sld [smem:[#allocation2 + $0x45]]
        %v437 = vstv %s436
        %v438 = vmul.f32 %v227, %v437
        %v439 = vadd.f32 %v435, %v438
        %s440 = sld [smem:[#allocation2 + $0x4b]]
        %v441 = vstv %s440
        %v442 = vmul.f32 %v234, %v441
        %v443 = vadd.f32 %v439, %v442
        %s444 = sld [smem:[#allocation2 + $0x51]]
        %v445 = vstv %s444
        %v446 = vmul.f32 %v241, %v445
        %v447 = vadd.f32 %v443, %v446
        %s448 = sld [smem:[#allocation2 + $0x57]]
        %v449 = vstv %s448
        %v450 = vmul.f32 %v248, %v449
        %v451 = vadd.f32 %v447, %v450
        %s452 = sld [smem:[#allocation2 + $0x5d]]
        %v453 = vstv %s452
        %v454 = vmul.f32 %v255, %v453
        %v455 = vadd.f32 %v451, %v454
        %s456 = sld [smem:[#allocation2 + $0x63]]
        %v457 = vstv %s456
        %v458 = vadd.f32 %v455, %v457
        %v459 = vmax.f32 %v458, 0.0
        %s460 = sld [smem:[#allocation2 + $0x1c]]
        %v461 = vstv %s460
        %v462 = vmul.f32 %v178, %v461
        %s463 = sld [smem:[#allocation2 + $0x22]]
        %v464 = vstv %s463
        %v465 = vmul.f32 %v185, %v464
        %v466 = vadd.f32 %v462, %v465
        %s467 = sld [smem:[#allocation2 + $0x28]]
        %v468 = vstv %s467
        %v469 = vmul.f32 %v192, %v468
        %v470 = vadd.f32 %v466, %v469
        %s471 = sld [smem:[#allocation2 + $0x2e]]
        %v472 = vstv %s471
        %v473 = vmul.f32 %v199, %v472
        %v474 = vadd.f32 %v470, %v473
        %s475 = sld [smem:[#allocation2 + $0x34]]
        %v476 = vstv %s475
        %v477 = vmul.f32 %v206, %v476
        %v478 = vadd.f32 %v474, %v477
        %s479 = sld [smem:[#allocation2 + $0x3a]]
        %v480 = vstv %s479
        %v481 = vmul.f32 %v213, %v480
        %v482 = vadd.f32 %v478, %v481
        %s483 = sld [smem:[#allocation2 + $0x40]]
        %v484 = vstv %s483
        %v485 = vmul.f32 %v220, %v484
        %v486 = vadd.f32 %v482, %v485
        %s487 = sld [smem:[#allocation2 + $0x46]]
        %v488 = vstv %s487
        %v489 = vmul.f32 %v227, %v488
        %v490 = vadd.f32 %v486, %v489
        %s491 = sld [smem:[#allocation2 + $0x4c]]
        %v492 = vstv %s491
        %v493 = vmul.f32 %v234, %v492
        %v494 = vadd.f32 %v490, %v493
        %s495 = sld [smem:[#allocation2 + $0x52]]
        %v496 = vstv %s495
        %v497 = vmul.f32 %v241, %v496
        %v498 = vadd.f32 %v494, %v497
        %s499 = sld [smem:[#allocation2 + $0x58]]
        %v500 = vstv %s499
        %v501 = vmul.f32 %v248, %v500
        %v502 = vadd.f32 %v498, %v501
        %s503 = sld [smem:[#allocation2 + $0x5e]]
        %v504 = vstv %s503
        %v505 = vmul.f32 %v255, %v504
        %v506 = vadd.f32 %v502, %v505
        %s507 = sld [smem:[#allocation2 + $0x64]]
        %v508 = vstv %s507
        %v509 = vadd.f32 %v506, %v508
        %v510 = vmax.f32 %v509, 0.0
        %s511 = sld [smem:[#allocation2 + $0x1d]]
        %v512 = vstv %s511
        %v513 = vmul.f32 %v178, %v512
        %s514 = sld [smem:[#allocation2 + $0x23]]
        %v515 = vstv %s514
        %v516 = vmul.f32 %v185, %v515
        %v517 = vadd.f32 %v513, %v516
        %s518 = sld [smem:[#allocation2 + $0x29]]
        %v519 = vstv %s518
        %v520 = vmul.f32 %v192, %v519
        %v521 = vadd.f32 %v517, %v520
        %s522 = sld [smem:[#allocation2 + $0x2f]]
        %v523 = vstv %s522
        %v524 = vmul.f32 %v199, %v523
        %v525 = vadd.f32 %v521, %v524
        %s526 = sld [smem:[#allocation2 + $0x35]]
        %v527 = vstv %s526
        %v528 = vmul.f32 %v206, %v527
        %v529 = vadd.f32 %v525, %v528
        %s530 = sld [smem:[#allocation2 + $0x3b]]
        %v531 = vstv %s530
        %v532 = vmul.f32 %v213, %v531
        %v533 = vadd.f32 %v529, %v532
        %s534 = sld [smem:[#allocation2 + $0x41]]
        %v535 = vstv %s534
        %v536 = vmul.f32 %v220, %v535
        %v537 = vadd.f32 %v533, %v536
        %s538 = sld [smem:[#allocation2 + $0x47]]
        %v539 = vstv %s538
        %v540 = vmul.f32 %v227, %v539
        %v541 = vadd.f32 %v537, %v540
        %s542 = sld [smem:[#allocation2 + $0x4d]]
        %v543 = vstv %s542
        %v544 = vmul.f32 %v234, %v543
        %v545 = vadd.f32 %v541, %v544
        %s546 = sld [smem:[#allocation2 + $0x53]]
        %v547 = vstv %s546
        %v548 = vmul.f32 %v241, %v547
        %v549 = vadd.f32 %v545, %v548
        %s550 = sld [smem:[#allocation2 + $0x59]]
        %v551 = vstv %s550
        %v552 = vmul.f32 %v248, %v551
        %v553 = vadd.f32 %v549, %v552
        %s554 = sld [smem:[#allocation2 + $0x5f]]
        %v555 = vstv %s554
        %v556 = vmul.f32 %v255, %v555
        %v557 = vadd.f32 %v553, %v556
        %s558 = sld [smem:[#allocation2 + $0x65]]
        %v559 = vstv %s558
        %v560 = vadd.f32 %v557, %v559
        %v561 = vmax.f32 %v560, 0.0
        %s562 = sld [smem:[#allocation2 + $0x66]]
        %v563 = vstv %s562
        %v564 = vmul.f32 %v306, %v563
        %s565 = sld [smem:[#allocation2 + $0x67]]
        %v566 = vstv %s565
        %v567 = vmul.f32 %v357, %v566
        %v568 = vadd.f32 %v564, %v567
        %s569 = sld [smem:[#allocation2 + $0x68]]
        %v570 = vstv %s569
        %v571 = vmul.f32 %v408, %v570
        %v572 = vadd.f32 %v568, %v571
        %s573 = sld [smem:[#allocation2 + $0x69]]
        %v574 = vstv %s573
        %v575 = vmul.f32 %v459, %v574
        %v576 = vadd.f32 %v572, %v575
        %s577 = sld [smem:[#allocation2 + $0x6a]]
        %v578 = vstv %s577
        %v579 = vmul.f32 %v510, %v578
        %v580 = vadd.f32 %v576, %v579
        %s581 = sld [smem:[#allocation2 + $0x6b]]
        %v582 = vstv %s581
        %v583 = vmul.f32 %v561, %v582
        %v584 = vadd.f32 %v580, %v583
        %s585 = sld [smem:[#allocation2 + $0x6c]]
        %v586 = vstv %s585
        %v587 = vadd.f32 %v584, %v586
        %588 = vst [vmem:[%s170] sm:$0xff] %v587
        %s589 = sand.u32 %s75, 1
        %s590 = scalar_lea.sflag [#allocation4], %s589
        %s591 = sand.u32 %s75, 1
        %s592 = smul.addr %s591, 8
        %s593 = scalar_lea.vmem [#allocation7], %s592
        // Predicated region
        $region37: #{tpu_custom_call.1} parent=27 // pred_check
          %p594 = pneg %p85
        $region38: #{tpu_custom_call.1} parent=27 // pred_check_branch
          %596 = sbr.rel (%p594) target = $region40
        $region39: #{tpu_custom_call.1} parent=27 // pred_region
          %s598 = ssub.s32 128, 128
          %599 = vsyncadd %s590, %s598
          %s600 = smul.addr %s20, 128
          %s601 = scalar_lea.hbm %s2, %s600
          %s603 = sshll.u32 %s593, 4
          %s604 = int_to_ptr.vmem [resolvable:$true] %s603
          %606 = dma.vmem_to_hbm [thread:$0]  %s604, 128, %s601, %s590
        $region40: #{tpu_custom_call.1} parent=27 // pred_fallthru
          _
      $region28: #{tpu_custom_call.1} parent=5 // pred_fallthru
        _
      %p607 = scmp.le.s32.totalorder 2, %s15
      // Predicated region
      $region41: #{tpu_custom_call.1} parent=5 // pred_check
        %p608 = pneg %p607
      $region42: #{tpu_custom_call.1} parent=5 // pred_check_branch
        %610 = sbr.rel (%p608) target = $region44
      $region43: #{tpu_custom_call.1} parent=5 // pred_region
        %s611 = ssub.s32 %s15, 2
        // Predicated region
        $region45: #{tpu_custom_call.1} parent=43 // pred_check
          %p612 = pneg %p91
        $region46: #{tpu_custom_call.1} parent=43 // pred_check_branch
          %614 = sbr.rel (%p612) target = $region48
        $region47: #{tpu_custom_call.1} parent=43 // pred_region
          %s615 = sand.u32 %s76, 1
          %s616 = scalar_lea.sflag [#allocation4], %s615
          %s617 = sand.u32 %s76, 1
          %s618 = smul.addr %s617, 8
          %s619 = scalar_lea.vmem [#allocation7], %s618
          %620 = dma.done %s616, 128
        $region48: #{tpu_custom_call.1} parent=43 // pred_fallthru
          _
      $region44: #{tpu_custom_call.1} parent=5 // pred_fallthru
        _
    $region6: #{tpu_custom_call.1} parent=1 // loop_footer
      %s19 = sadd.s32 1, %s15
    $region7: #{tpu_custom_call.1} parent=1 // loop_footer_branch
      %14 = sbr.rel target = $region3
    $region8: #{tpu_custom_call.1} parent=1 // loop_exit
      _
    %621 = vsyncpa [#allocation3], 1
    %s622 = scalar_lea.sflag [#allocation3], 1
    %623 = vsyncpa %s622, 1
    %624 = vsyncpa [#allocation4], 1
    %s625 = scalar_lea.sflag [#allocation4], 1
    %626 = vsyncpa %s625, 1
    %627 = vsyncpa [#allocation5], 1
    %s628 = scalar_lea.sflag [#allocation5], 1
    %629 = vsyncpa %s628, 1

</llo_original>
